<compile_context>
chip_gen: v6e
topology: v6e:2x2x1
jax: 0.10.0
libtpu: 0.0.40
codegen_flags: <defaults>
</compile_context>

<pallas_src>
import functools

import jax
import jax.numpy as jnp
from jax.experimental import pallas as pl
from jax.experimental.pallas import tpu as pltpu

EPS = 1e-5  # PyTorch InstanceNorm2d default eps.


# ---------------------------------------------------------------------------
# Kernels
# ---------------------------------------------------------------------------
def _adain_fused_kernel(gb_ref, x_ref, o_ref, *, inv_hw):
    """One (TR, HW) row tile: stats + normalize + affine in a single pass.

    gb_ref : (TR, 2)   [:, 0] = gamma, [:, 1] = beta
    x_ref  : (TR, HW)  one full instance-norm row per sublane row
    o_ref  : (TR, HW)
    """
    x = x_ref[...].astype(jnp.float32)

    # Single-pass statistics; lane extent is exactly HW -> no padding, no mask.
    s1 = jnp.sum(x, axis=-1, keepdims=True)
    s2 = jnp.sum(x * x, axis=-1, keepdims=True)
    mean = s1 * inv_hw
    var = jnp.maximum(s2 * inv_hw - mean * mean, 0.0)  # f32 cancellation guard

    gb = gb_ref[...].astype(jnp.float32)
    scale = jax.lax.rsqrt(var + EPS) * (1.0 + gb[:, 0:1])  # rsqrt on EUP slot
    shift = gb[:, 1:2] - mean * scale

    o_ref[...] = (x * scale + shift).astype(o_ref.dtype)


def _stats_kernel(x_ref, s1_ref, s2_ref, *, hw, thw, need_mask):
    """Large-H*W path, pass 1: accumulate per-row sum / sum-sq over spatial tiles."""
    j = pl.program_id(1)

    @pl.when(j == 0)
    def _():
        s1_ref[...] = jnp.zeros_like(s1_ref)
        s2_ref[...] = jnp.zeros_like(s2_ref)

    x = x_ref[...].astype(jnp.float32)
    if need_mask:  # ragged spatial tail: zero out lanes beyond the true H*W
        col = j * thw + jax.lax.broadcasted_iota(jnp.int32, x.shape, 1)
        x = jnp.where(col < hw, x, 0.0)
    s1_ref[...] += jnp.sum(x, axis=-1, keepdims=True)
    s2_ref[...] += jnp.sum(x * x, axis=-1, keepdims=True)


def _apply_kernel(gb_ref, s1_ref, s2_ref, x_ref, o_ref, *, inv_hw):
    """Large-H*W path, pass 2: normalize + affine using precomputed row stats."""
    x = x_ref[...].astype(jnp.float32)
    mean = s1_ref[...] * inv_hw
    var = jnp.maximum(s2_ref[...] * inv_hw - mean * mean, 0.0)

    gb = gb_ref[...].astype(jnp.float32)
    scale = jax.lax.rsqrt(var + EPS) * (1.0 + gb[:, 0:1])
    shift = gb[:, 1:2] - mean * scale

    o_ref[...] = (x * scale + shift).astype(o_ref.dtype)


# ---------------------------------------------------------------------------
# Tiling / VMEM helpers
# ---------------------------------------------------------------------------
def _round_up(v, m):
    return (v + m - 1) // m * m


def _vmem_capacity_bytes():
    try:
        return int(pltpu.get_tpu_info().vmem_capacity_bytes)
    except Exception:
        return 64 * 1024 * 1024  # v7x-safe fallback (smallest VMEM)


def _vmem_limit_bytes(block_bytes, capacity):
    # ~2 double-buffered input + 2 double-buffered output blocks + slack,
    # kept under ~3/4 of physical VMEM (v7x has only 64 MiB per TensorCore).
    need = 4 * block_bytes + (4 << 20)
    return int(min(capacity * 3 // 4, max(32 << 20, need)))


def _choose_row_tile(rows, hw, itemsize, target_bytes):
    """Largest row tile (multiple of 8, or the full row count) whose (TR, HW)
    block stays under target_bytes; prefers divisors of `rows` and >= 2 grid
    steps so both v7x TensorCores get work."""
    if rows <= 8:
        return rows
    row_bytes = max(1, hw * itemsize)
    cap = max(8, min(rows, (target_bytes // row_bytes) // 8 * 8))
    if cap >= rows:
        # Whole tensor would be one block: split into >=2 parallel steps.
        cap = max(8, _round_up(pl.cdiv(rows, 2), 8))
    if rows % 8 == 0:
        for tr in range(min(cap, rows), 7, -8):
            if rows % tr == 0:  # divisor -> no wasted traffic in the last block
                return tr
    return cap


# ---------------------------------------------------------------------------
# Wrapper
# ---------------------------------------------------------------------------
@functools.partial(jax.jit,
                   static_argnames=("target_block_bytes", "max_fused_block_bytes"))
def adain2d(x, s, w, b, target_block_bytes=None, max_fused_block_bytes=None):
    """x: (N, C, H, W), s: (N, S), w: (2C, S) [nn.Linear weight], b: (2C,)."""
    N, C, H, W = x.shape
    HW = H * W
    rows = N * C
    itemsize = jnp.dtype(x.dtype).itemsize

    capacity = _vmem_capacity_bytes()
    if target_block_bytes is None:
        target_block_bytes = 4 << 20            # ~4 MiB blocks
    if max_fused_block_bytes is None:
        max_fused_block_bytes = capacity // 6   # 4x block + slack fits VMEM

    # Tiny style FC hoisted out of the kernel (XLA handles the (N,S)x(S,2C) GEMM).
    h = s @ w.T + b                                       # (N, 2C)
    gb = jnp.stack([h[:, :C], h[:, C:]], axis=-1)         # (N, C, 2): gamma, beta
    gb = gb.reshape(rows, 2)

    # (N, C, H, W) -> (N*C, H*W): free row-major reshape. No pads, no slices.
    x2 = x.reshape(rows, HW)
    inv_hw = 1.0 / HW

    min_block_bytes = min(8, rows) * HW * itemsize
    if min_block_bytes <= max_fused_block_bytes:
        # ---- Fused single-pass path: 1 HBM read + 1 HBM write of x. ----
        tr = _choose_row_tile(rows, HW, itemsize, target_block_bytes)
        block_bytes = tr * HW * itemsize
        out2 = pl.pallas_call(
            functools.partial(_adain_fused_kernel, inv_hw=inv_hw),
            out_shape=jax.ShapeDtypeStruct((rows, HW), x.dtype),
            grid_spec=pltpu.PrefetchScalarGridSpec(
                num_scalar_prefetch=0,
                grid=(pl.cdiv(rows, tr),),
                in_specs=[
                    pl.BlockSpec((tr, 2), lambda i: (i, 0)),    # gamma/beta
                    pl.BlockSpec((tr, HW), lambda i: (i, 0)),   # x rows
                ],
                out_specs=pl.BlockSpec((tr, HW), lambda i: (i, 0)),
            ),
            compiler_params=pltpu.CompilerParams(
                dimension_semantics=("parallel",),
                vmem_limit_bytes=_vmem_limit_bytes(block_bytes, capacity)),
        )(gb, x2)
    else:
        # ---- Large-H*W path: spatial tiling, stats sweep then apply sweep. ----
        tr = min(8, rows)
        thw = max(128, (target_block_bytes // max(1, tr * itemsize)) // 128 * 128)
        thw = min(thw, _round_up(HW, 128))
        block_bytes = tr * thw * itemsize
        vmem_limit = _vmem_limit_bytes(block_bytes, capacity)
        row_tiles = pl.cdiv(rows, tr)
        hw_tiles = pl.cdiv(HW, thw)

        sum1, sum2 = pl.pallas_call(
            functools.partial(_stats_kernel, hw=HW, thw=thw,
                              need_mask=(HW % thw) != 0),
            out_shape=(jax.ShapeDtypeStruct((rows, 1), jnp.float32),
                       jax.ShapeDtypeStruct((rows, 1), jnp.float32)),
            grid_spec=pltpu.PrefetchScalarGridSpec(
                num_scalar_prefetch=0,
                grid=(row_tiles, hw_tiles),
                in_specs=[pl.BlockSpec((tr, thw), lambda i, j: (i, j))],
                out_specs=(pl.BlockSpec((tr, 1), lambda i, j: (i, 0)),
                           pl.BlockSpec((tr, 1), lambda i, j: (i, 0))),
            ),
            compiler_params=pltpu.CompilerParams(
                dimension_semantics=("parallel", "arbitrary"),
                vmem_limit_bytes=vmem_limit),
        )(x2)

        out2 = pl.pallas_call(
            functools.partial(_apply_kernel, inv_hw=inv_hw),
            out_shape=jax.ShapeDtypeStruct((rows, HW), x.dtype),
            grid_spec=pltpu.PrefetchScalarGridSpec(
                num_scalar_prefetch=0,
                grid=(row_tiles, hw_tiles),
                in_specs=[
                    pl.BlockSpec((tr, 2), lambda i, j: (i, 0)),     # gamma/beta
                    pl.BlockSpec((tr, 1), lambda i, j: (i, 0)),     # sum
                    pl.BlockSpec((tr, 1), lambda i, j: (i, 0)),     # sum of squares
                    pl.BlockSpec((tr, thw), lambda i, j: (i, j)),   # x tile
                ],
                out_specs=pl.BlockSpec((tr, thw), lambda i, j: (i, j)),
            ),
            compiler_params=pltpu.CompilerParams(
                dimension_semantics=("parallel", "parallel"),
                vmem_limit_bytes=vmem_limit),
        )(gb, sum1, sum2, x2)

    return out2.reshape(N, C, H, W)


def adain2d_ref(x, s, w, b):
    """Pure-JAX reference mirroring the PyTorch forward."""
    N, C, H, W = x.shape
    h = s @ w.T + b                                  # (N, 2C)
    gamma = h[:, :C].reshape(N, C, 1, 1)
    beta = h[:, C:].reshape(N, C, 1, 1)
    mean = jnp.mean(x, axis=(2, 3), keepdims=True)
    var = jnp.mean(jnp.square(x - mean), axis=(2, 3), keepdims=True)
    xhat = (x - mean) * jax.lax.rsqrt(var + EPS)
    return (1.0 + gamma) * xhat + beta


if __name__ == "__main__":
    key = jax.random.PRNGKey(0)
    N, C, H, W = 2, 4, 16, 16
    style_dim = 8

    kx, ks, kw, kb = jax.random.split(key, 4)
    x = jax.random.normal(kx, (N, C, H, W), dtype=jnp.float32)
    s = jax.random.normal(ks, (N, style_dim), dtype=jnp.float32)
    # nn.Linear(style_dim, 2*C): weight (2C, S), bias (2C,)
    w = jax.random.normal(kw, (2 * C, style_dim), dtype=jnp.float32) * 0.1
    b = jax.random.normal(kb, (2 * C,), dtype=jnp.float32) * 0.1

    out = adain2d(x, s, w, b)
    jax.block_until_ready(out)
    ref = adain2d_ref(x, s, w, b)
    assert out.shape == (N, C, H, W)
    assert jnp.allclose(out, ref, atol=1e-4, rtol=1e-4), "fused path mismatch"

    # Ragged shapes (H*W % 128 != 0, rows < 8): handled in-kernel, no pad copies.
    x2 = jax.random.normal(kx, (1, 6, 15, 13), dtype=jnp.float32)
    s2 = jax.random.normal(ks, (1, style_dim), dtype=jnp.float32)
    w2 = jax.random.normal(kw, (12, style_dim), dtype=jnp.float32) * 0.1
    b2 = jax.random.normal(kb, (12,), dtype=jnp.float32) * 0.1
    ref2 = adain2d_ref(x2, s2, w2, b2)
    o2 = adain2d(x2, s2, w2, b2)
    jax.block_until_ready(o2)
    assert jnp.allclose(o2, ref2, atol=1e-4, rtol=1e-4), "ragged fused mismatch"

    # Force the large-H*W split path (stats + apply, masked spatial tail) at
    # small shapes to validate the VMEM-guard fallback.
    o3 = adain2d(x2, s2, w2, b2, target_block_bytes=1024, max_fused_block_bytes=1024)
    jax.block_until_ready(o3)
    assert jnp.allclose(o3, ref2, atol=1e-4, rtol=1e-4), "split path mismatch"

    print("KERNEL_OK")
</pallas_src>

<mosaic_0001>
module attributes {stable_mosaic.version = 11 : i64} {
  func.func @_adain_fused_kernel(%arg0: i32, %arg1: memref<8x2xf32, #tpu.memory_space<vmem>>, %arg2: memref<8x256xf32, #tpu.memory_space<vmem>>, %arg3: memref<8x256xf32, #tpu.memory_space<vmem>>) attributes {dimension_semantics = [#tpu.dimension_semantics<parallel>], iteration_bounds = array<i64: 1>, scalar_prefetch = 0 : i64, scratch_operands = 0 : i64, tpu.core_type = #tpu.core_type<tc>, window_params = [{transform_indices = @transform_0, window_bounds = array<i64: 8, 2>}, {transform_indices = @transform_1, window_bounds = array<i64: 8, 256>}, {transform_indices = @transform_2, window_bounds = array<i64: 8, 256>}]} {
    %c0 = arith.constant 0 : index
    %c0_0 = arith.constant 0 : index
    %0 = vector.load %arg2[%c0, %c0_0] : memref<8x256xf32, #tpu.memory_space<vmem>>, vector<8x256xf32>
    %cst = arith.constant dense<0.000000e+00> : vector<8xf32>
    %1 = vector.multi_reduction <add>, %0, %cst [1] : vector<8x256xf32> to vector<8xf32>
    %2 = vector.shape_cast %1 : vector<8xf32> to vector<8x1xf32>
    %3 = arith.mulf %0, %0 : vector<8x256xf32>
    %cst_1 = arith.constant dense<0.000000e+00> : vector<8xf32>
    %4 = vector.multi_reduction <add>, %3, %cst_1 [1] : vector<8x256xf32> to vector<8xf32>
    %5 = vector.shape_cast %4 : vector<8xf32> to vector<8x1xf32>
    %cst_2 = arith.constant 3.906250e-03 : f32
    %6 = vector.broadcast %cst_2 : f32 to vector<8x1xf32>
    %7 = arith.mulf %2, %6 : vector<8x1xf32>
    %cst_3 = arith.constant 3.906250e-03 : f32
    %8 = vector.broadcast %cst_3 : f32 to vector<8x1xf32>
    %9 = arith.mulf %5, %8 : vector<8x1xf32>
    %10 = arith.mulf %7, %7 : vector<8x1xf32>
    %11 = arith.subf %9, %10 : vector<8x1xf32>
    %cst_4 = arith.constant 0.000000e+00 : f32
    %12 = vector.broadcast %cst_4 : f32 to vector<8x1xf32>
    %13 = arith.maximumf %11, %12 : vector<8x1xf32>
    %c0_5 = arith.constant 0 : index
    %c0_6 = arith.constant 0 : index
    %14 = vector.load %arg1[%c0_5, %c0_6] : memref<8x2xf32, #tpu.memory_space<vmem>>, vector<8x2xf32>
    %cst_7 = arith.constant 9.99999974E-6 : f32
    %15 = vector.broadcast %cst_7 : f32 to vector<8x1xf32>
    %16 = arith.addf %13, %15 : vector<8x1xf32>
    %17 = math.rsqrt %16 : vector<8x1xf32>
    %18 = vector.extract_strided_slice %14 {offsets = [0, 0], sizes = [8, 1], strides = [1, 1]} : vector<8x2xf32> to vector<8x1xf32>
    %cst_8 = arith.constant 1.000000e+00 : f32
    %19 = vector.broadcast %cst_8 : f32 to vector<8x1xf32>
    %20 = arith.addf %19, %18 : vector<8x1xf32>
    %21 = arith.mulf %17, %20 : vector<8x1xf32>
    %22 = vector.extract_strided_slice %14 {offsets = [0, 1], sizes = [8, 1], strides = [1, 1]} : vector<8x2xf32> to vector<8x1xf32>
    %23 = arith.mulf %7, %21 : vector<8x1xf32>
    %24 = arith.subf %22, %23 : vector<8x1xf32>
    %25 = vector.broadcast %21 : vector<8x1xf32> to vector<8x256xf32>
    %26 = arith.mulf %0, %25 : vector<8x256xf32>
    %27 = vector.broadcast %24 : vector<8x1xf32> to vector<8x256xf32>
    %28 = arith.addf %26, %27 : vector<8x256xf32>
    %c0_9 = arith.constant 0 : index
    %c0_10 = arith.constant 0 : index
    %29 = vector.load %arg3[%c0_9, %c0_10] : memref<8x256xf32, #tpu.memory_space<vmem>>, vector<8x256xf32>
    tpu.vector_store %arg3[%c0_9, %c0_10], %28 {strides = array<i32>} : memref<8x256xf32, #tpu.memory_space<vmem>>, vector<8x256xf32>,
    return
  }
  func.func @transform_0(%arg0: i32) -> (i32, i32) {
    %c0_i32 = arith.constant 0 : i32
    %c0_i32_0 = arith.constant 0 : i32
    return %arg0, %c0_i32 : i32, i32
  }
  func.func @transform_1(%arg0: i32) -> (i32, i32) {
    %c0_i32 = arith.constant 0 : i32
    %c0_i32_0 = arith.constant 0 : i32
    return %arg0, %c0_i32 : i32, i32
  }
  func.func @transform_2(%arg0: i32) -> (i32, i32) {
    %c0_i32 = arith.constant 0 : i32
    %c0_i32_0 = arith.constant 0 : i32
    return %arg0, %c0_i32 : i32, i32
  }
}

</mosaic_0001>

<llo_original>
// kernel: adain2d.1
$region0: #{adain2d.1}
  #allocation0 [shape = 'u32[]', space=smem, size = 0x4, offset = 0x4, fixed_abs, tag = 'smem constant byte address 0x4 - core index']
  #allocation1 [shape = 'u32[144,128]{1,0:T(1,128)}', space=vmem, size = 0x12000, scoped, tag = 'internal scratch']
  %s0 = inlined_call_operand.vmem [shape: f32[8,2], index: 0, kind: input, shape index: {}]
  %s1 = inlined_call_operand.vmem [shape: f32[8,256], index: 1, kind: input, shape index: {}]
  %s2 = inlined_call_operand.vmem [shape: f32[8,256], index: 2, kind: output, shape index: {}]
  %s3 = sld [smem:[#allocation0]]
  $region18: #{adain2d.1} parent=0
    _
  %s5 = ssub.s32 1, %s3
  %s6 = scalar_select 0, %s5, %s3
  // Predicated region
  $region2: #{adain2d.1} parent=0 // pred_check
    _
  $region3: #{adain2d.1} parent=0 // pred_check_branch
    %8 = sbr.rel (0) target = $region5
  $region4: #{adain2d.1} parent=0 // pred_region
    _
  $region5: #{adain2d.1} parent=0 // pred_fallthru
    _
  // Predicated region
  $region6: #{adain2d.1} parent=0 // pred_check
    _
  $region7: #{adain2d.1} parent=0 // pred_check_branch
    %10 = sbr.rel (0) target = $region9
  $region8: #{adain2d.1} parent=0 // pred_region
    _
  $region9: #{adain2d.1} parent=0 // pred_fallthru
    _
  %v11 = vld [vmem:[%s1] sm:$0xff]
  %v12 = vld [vmem:[%s1 + $0x8] sm:$0xff]
  %v13 = vadd.f32 %v11, %v12
  %14 = vadd.xlane.f32.xlu0 %v13
  %v15 = vpop.xlane.xlu0 %14
  %v16 = vmul.f32 %v11, %v11
  %v17 = vmul.f32 %v12, %v12
  %v18 = vadd.f32 %v16, %v17
  %19 = vadd.xlane.f32.xlu0 %v18
  %v20 = vpop.xlane.xlu0 %19
  %v21 = vmul.f32 %v15, 0.00390625
  %v22 = vmul.f32 %v20, 0.00390625
  %v23 = vmul.f32 %v21, %v21
  %v24 = vsub.f32 %v22, %v23
  %v25 = vmax.f32 %v24, 0.0
  %v26 = vld [vmem:[%s0] sm:$0xff]
  %v27 = vadd.f32 %v25, 1e-05
  %v28 = vrsqrt.pop %v27
  %v29 = vadd.f32 %v26, 1.0
  %v30 = vmul.f32 %v28, %v29
  %v31 = vmul.f32 %v21, %v30
  %33 = vrot.lane.b32.xlu0 %v31, 1
  %v34 = vpop.permute.xlu0 %33
  %v36 = vsub.f32 %v26, %v34
  %38 = vset.pattern.permute.xlu0 0
  %39 = vperm.xlu0 %38, %v30
  %v40 = vpop.permute.xlu0 %39
  %v42 = vmul.f32 %v11, %v40
  %v43 = vmul.f32 %v12, %v40
  %45 = vset.pattern.permute.xlu0 1
  %46 = vperm.xlu0 %45, %v36
  %v47 = vpop.permute.xlu0 %46
  %v49 = vadd.f32 %v42, %v47
  %v50 = vadd.f32 %v43, %v47
  %51 = vst [vmem:[%s2] sm:$0xff] %v49
  %52 = vst [vmem:[%s2 + $0x8] sm:$0xff] %v50
  // Predicated region
  $region10: #{adain2d.1} parent=0 // pred_check
    _
  $region11: #{adain2d.1} parent=0 // pred_check_branch
    %54 = sbr.rel (0) target = $region13
  $region12: #{adain2d.1} parent=0 // pred_region
    _
  $region13: #{adain2d.1} parent=0 // pred_fallthru
    _
  // Predicated region
  $region14: #{adain2d.1} parent=0 // pred_check
    _
  $region15: #{adain2d.1} parent=0 // pred_check_branch
    %56 = sbr.rel (0) target = $region17
  $region16: #{adain2d.1} parent=0 // pred_region
    _
  $region17: #{adain2d.1} parent=0 // pred_fallthru
    _

</llo_original>
